<compile_context>
chip_gen: v7x
topology: tpu7x:2x2x1
jax: 0.10.0
libtpu: 0.0.40
codegen_flags: <defaults>
</compile_context>

<pallas_src>
import functools

import jax
import jax.numpy as jnp
from jax.experimental import pallas as pl
from jax.experimental.pallas import tpu as pltpu


_TARGET_BLOCK_BYTES = 4 * 1024 * 1024   # ~2-8 MiB input per grid step is the sweet spot
_MIN_BLOCK_BYTES = 512 * 1024           # never shrink a DMA below this for step-count goals


def _rmsnorm_kernel(eps, x_ref, w_ref, o_ref):
    # Torch semantics:
    #   x32 = x.to(float32)
    #   var = mean(x32**2, -1, keepdim=True)
    #   out = weight * (x32 * rsqrt(var + eps)).to(input_dtype)
    x32 = x_ref[...].astype(jnp.float32)
    var = jnp.mean(x32 * x32, axis=-1, keepdims=True)
    inv = jax.lax.rsqrt(var + eps)
    normed = x32 * inv
    if x_ref.dtype != jnp.float32:
        # Round back to the input dtype before the weight multiply (torch parity).
        normed = normed.astype(x_ref.dtype)
    out = w_ref[...] * normed  # (1, hidden) * (tile, hidden), promotes like torch
    o_ref[...] = out.astype(o_ref.dtype)


def _vmem_capacity_bytes():
    """Per-core VMEM capacity; conservative fallback (v7x: 64 MiB) if query fails."""
    try:
        cap = int(pltpu.get_tpu_info().vmem_capacity_bytes)
        if cap > 0:
            return cap
    except Exception:
        pass
    return 64 * 1024 * 1024


def _sublane_multiple(itemsize):
    # Native sublane packing: 8 rows for 4-byte, 16 for 2-byte, 32 for 1-byte dtypes.
    return max(8, 8 * (4 // max(1, int(itemsize))))


def _pick_row_tile(rows, hidden, in_itemsize, out_itemsize):
    """Large, VMEM-safe, byte-targeted row tile with v7x-friendly step shaping."""
    sub = max(_sublane_multiple(in_itemsize), _sublane_multiple(out_itemsize))
    row_in_bytes = hidden * in_itemsize

    # Per-row VMEM footprint: double-buffered input + output pipeline blocks, plus
    # the in-kernel f32 temporaries (x32 and normed: ~8 B per element per live row).
    per_row_bytes = 2 * hidden * (in_itemsize + out_itemsize) + 8 * hidden
    budget = max(_vmem_capacity_bytes() - 16 * 1024 * 1024, 8 * 1024 * 1024)
    cap = max(sub, (budget // per_row_bytes) // sub * sub)

    padded_rows = pl.cdiv(rows, sub) * sub
    # Byte-targeted tile: ~4 MiB of input per step (instead of a fixed row cap).
    target = max(sub, (_TARGET_BLOCK_BYTES // row_in_bytes) // sub * sub)
    tile = min(cap, target, padded_rows)
    tile = max(sub, (tile // sub) * sub)

    def block_bytes(t):
        return t * row_in_bytes

    # Aim for >= 4 grid steps (>= 2 pipelined steps per TensorCore on v7x), but
    # only while each DMA stays comfortably large; on single-TC chips this only
    # buys pipeline overlap and never pushes tiles into the per-step-overhead regime.
    while pl.cdiv(rows, tile) < 4:
        smaller = max(sub, ((tile // 2) // sub) * sub)
        if smaller == tile or block_bytes(smaller) < _MIN_BLOCK_BYTES:
            break
        tile = smaller

    # Nudge to an even step count so v7x's two cores get balanced work.
    steps = pl.cdiv(rows, tile)
    if steps >= 4 and steps % 2 == 1:
        alt = max(sub, pl.cdiv(pl.cdiv(rows, steps + 1), sub) * sub)
        if pl.cdiv(rows, alt) % 2 == 0 and block_bytes(alt) >= _MIN_BLOCK_BYTES:
            tile = alt
    return tile


def rmsnorm(x, weight, eps=1e-6, *, row_tile=None, out_dtype=None):
    """x: (..., hidden); weight: (hidden,).

    out_dtype defaults to torch's promotion (weight.dtype x input dtype), which
    for the common f32-weight + bf16-activation stack emits f32. Pass
    out_dtype=x.dtype to emit bf16 and cut HBM write traffic ~33% (intentional
    deviation from torch's promotion, numerically equivalent after the cast).
    """
    orig_shape = x.shape
    hidden = orig_shape[-1]
    x2d = x.reshape(-1, hidden)
    rows = x2d.shape[0]

    if out_dtype is None:
        out_dtype = jnp.promote_types(weight.dtype, x.dtype)  # torch: weight * x.to(input_dtype)
    out_dtype = jnp.dtype(out_dtype)
    in_itemsize = jnp.dtype(x.dtype).itemsize

    if row_tile is None:
        row_tile = _pick_row_tile(rows, hidden, in_itemsize, out_dtype.itemsize)
    # A block may not exceed the row extent unless it equals it exactly
    # (full-extent blocks of any size are always legal).
    if row_tile > rows:
        row_tile = rows

    # Ragged last block handled by Pallas: masked writes discard the OOB rows,
    # and the per-row reduction (hidden untiled) means they never contaminate
    # kept rows. No host-side pad/slice -> no extra HBM passes.
    grid = pl.cdiv(rows, row_tile)

    per_row_bytes = 2 * hidden * (in_itemsize + out_dtype.itemsize) + 8 * hidden
    vmem_limit = (per_row_bytes * row_tile
                  + 2 * hidden * jnp.dtype(weight.dtype).itemsize
                  + (2 << 20))
    vmem_limit = min(int(vmem_limit), _vmem_capacity_bytes() - (8 << 20))

    kernel = functools.partial(_rmsnorm_kernel, float(eps))

    out2d = pl.pallas_call(
        kernel,
        out_shape=jax.ShapeDtypeStruct((rows, hidden), out_dtype),
        grid_spec=pltpu.PrefetchScalarGridSpec(
            num_scalar_prefetch=0,
            grid=(grid,),
            in_specs=[
                pl.BlockSpec((row_tile, hidden), lambda i: (i, 0)),
                pl.BlockSpec((1, hidden), lambda i: (0, 0)),  # weight stays resident
            ],
            out_specs=pl.BlockSpec((row_tile, hidden), lambda i: (i, 0)),
        ),
        compiler_params=pltpu.CompilerParams(
            dimension_semantics=("parallel",),
            vmem_limit_bytes=int(vmem_limit),
        ),
    )(x2d, weight.reshape(1, hidden))

    return out2d.reshape(orig_shape[:-1] + (hidden,))


if __name__ == "__main__":
    # Small deterministic example consistent with the module (hidden on lanes).
    batch, seq, hidden = 2, 8, 128
    key = jax.random.PRNGKey(0)
    x = jax.random.normal(key, (batch, seq, hidden), dtype=jnp.float32)

    # Parameter init as in LlamaRMSNorm.__init__: weight = ones(hidden_size).
    weight = jnp.ones((hidden,), dtype=jnp.float32)
    eps = 1e-6

    out = rmsnorm(x, weight, eps)
    jax.block_until_ready(out)

    # Reference (same math as the PyTorch module).
    x32 = x.astype(jnp.float32)
    var = jnp.mean(x32 * x32, axis=-1, keepdims=True)
    ref = weight * (x32 * jax.lax.rsqrt(var + eps)).astype(x.dtype)
    assert out.shape == ref.shape
    assert jnp.allclose(out, ref, atol=1e-5, rtol=1e-5)

    # Ragged row count (15 rows -> ragged last block, no host pad/slice) + bf16 path.
    xr = jax.random.normal(jax.random.PRNGKey(1), (3, 5, hidden), dtype=jnp.bfloat16)
    outr = rmsnorm(xr, weight, eps)
    jax.block_until_ready(outr)
    xr32 = xr.astype(jnp.float32)
    varr = jnp.mean(xr32 * xr32, axis=-1, keepdims=True)
    refr = weight * (xr32 * jax.lax.rsqrt(varr + eps)).astype(xr.dtype)
    assert outr.dtype == refr.dtype
    assert jnp.allclose(outr, refr, atol=2e-2, rtol=2e-2)

    print("KERNEL_OK")
</pallas_src>

<mosaic_0001>
module attributes {stable_mosaic.version = 11 : i64} {
  func.func @_rmsnorm_kernel(%arg0: i32, %arg1: memref<16x128xf32, #tpu.memory_space<vmem>>, %arg2: memref<1x128xf32, #tpu.memory_space<vmem>>, %arg3: memref<16x128xf32, #tpu.memory_space<vmem>>) attributes {dimension_semantics = [#tpu.dimension_semantics<parallel>], iteration_bounds = array<i64: 1>, scalar_prefetch = 0 : i64, scratch_operands = 0 : i64, tpu.core_type = #tpu.core_type<tc>, window_params = [{transform_indices = @transform_0, window_bounds = array<i64: 16, 128>}, {pipeline_mode = #tpu.pipeline_mode<synchronous>, transform_indices = @transform_1, window_bounds = array<i64: 1, 128>}, {transform_indices = @transform_2, window_bounds = array<i64: 16, 128>}]} {
    %c0 = arith.constant 0 : index
    %c0_0 = arith.constant 0 : index
    %0 = vector.load %arg1[%c0, %c0_0] : memref<16x128xf32, #tpu.memory_space<vmem>>, vector<16x128xf32>
    %1 = arith.mulf %0, %0 : vector<16x128xf32>
    %cst = arith.constant dense<0.000000e+00> : vector<16xf32>
    %2 = vector.multi_reduction <add>, %1, %cst [1] : vector<16x128xf32> to vector<16xf32>
    %3 = vector.shape_cast %2 : vector<16xf32> to vector<16x1xf32>
    %cst_1 = arith.constant 1.280000e+02 : f32
    %4 = vector.broadcast %cst_1 : f32 to vector<16x1xf32>
    %5 = arith.divf %3, %4 : vector<16x1xf32>
    %cst_2 = arith.constant 9.99999997E-7 : f32
    %6 = vector.broadcast %cst_2 : f32 to vector<16x1xf32>
    %7 = arith.addf %5, %6 : vector<16x1xf32>
    %8 = math.rsqrt %7 : vector<16x1xf32>
    %9 = vector.broadcast %8 : vector<16x1xf32> to vector<16x128xf32>
    %10 = arith.mulf %0, %9 : vector<16x128xf32>
    %c0_3 = arith.constant 0 : index
    %c0_4 = arith.constant 0 : index
    %11 = vector.load %arg2[%c0_3, %c0_4] : memref<1x128xf32, #tpu.memory_space<vmem>>, vector<1x128xf32>
    %12 = vector.broadcast %11 : vector<1x128xf32> to vector<16x128xf32>
    %13 = arith.mulf %12, %10 : vector<16x128xf32>
    %c0_5 = arith.constant 0 : index
    %c0_6 = arith.constant 0 : index
    %14 = vector.load %arg3[%c0_5, %c0_6] : memref<16x128xf32, #tpu.memory_space<vmem>>, vector<16x128xf32>
    tpu.vector_store %arg3[%c0_5, %c0_6], %13 {strides = array<i32>} : memref<16x128xf32, #tpu.memory_space<vmem>>, vector<16x128xf32>,
    return
  }
  func.func @transform_0(%arg0: i32) -> (i32, i32) {
    %c0_i32 = arith.constant 0 : i32
    %c0_i32_0 = arith.constant 0 : i32
    return %arg0, %c0_i32 : i32, i32
  }
  func.func @transform_1(%arg0: i32) -> (i32, i32) {
    %c0_i32 = arith.constant 0 : i32
    %c0_i32_0 = arith.constant 0 : i32
    %c0_i32_1 = arith.constant 0 : i32
    return %c0_i32, %c0_i32_0 : i32, i32
  }
  func.func @transform_2(%arg0: i32) -> (i32, i32) {
    %c0_i32 = arith.constant 0 : i32
    %c0_i32_0 = arith.constant 0 : i32
    return %arg0, %c0_i32 : i32, i32
  }
}

</mosaic_0001>

<llo_original>
// kernel: tpu_custom_call.1
$region0: #{tpu_custom_call.1}
  #allocation0 [shape = 'u32[]', space=smem, size = 0x4, offset = 0x4, fixed_abs, tag = 'smem constant byte address 0x4 - core index']
  #allocation1 [shape = 'u32[144,128]{1,0:T(1,128)}', space=vmem, size = 0x12000, scoped, tag = 'internal scratch']
  %s0 = inlined_call_operand.hbm [shape: f32[16,128], index: 0, kind: input, shape index: {}]
  %s1 = inlined_call_operand.vmem [shape: f32[1,128], index: 1, kind: input, shape index: {}]
  %s2 = inlined_call_operand.hbm [shape: f32[16,128], index: 2, kind: output, shape index: {}]
  %s3 = sld [smem:[#allocation0]]
  $region22: #{tpu_custom_call.1} parent=0
    _
  %s5 = ssub.s32 1, %s3
  %s6 = scalar_select 0, %s5, %s3
  $region1: #{tpu_custom_call.1} parent=0
    #allocation2 [shape = 'u8[8192]{0}', space=vmem, size = 0x2000, scoped, tag = 'input window, operand 0, single buffered']
    #allocation3 [shape = 's32[1]{0}', space=sflag, size = 0x4, scoped, tag = 'scoped memory for tpu_custom_call.1']
    #allocation4 [shape = 's32[1]{0}', space=sflag, size = 0x4, scoped, tag = 'scoped memory for tpu_custom_call.1']
    #allocation5 [shape = 'u8[8192]{0}', space=vmem, size = 0x2000, scoped, tag = 'output window, operand 0, single buffered']
    %7 = vsyncpa [#allocation3], 0
    %8 = vsyncpa [#allocation4], 0
    // Predicated region
    $region2: #{tpu_custom_call.1} parent=1 // pred_check
      _
    $region3: #{tpu_custom_call.1} parent=1 // pred_check_branch
      %10 = sbr.rel (0) target = $region5
    $region4: #{tpu_custom_call.1} parent=1 // pred_region
      %s12 = ssub.s32 256, 256
      %13 = vsyncadd [#allocation3], %s12
      %s14 = sshll.u32 [#allocation2], 4
      %s15 = int_to_ptr.vmem [resolvable:$true] %s14
      %20 = dma.hbm_to_vmem [thread:$0]  %s0, 256, %s15, [#allocation3], 128, 128, 8
    $region5: #{tpu_custom_call.1} parent=1 // pred_fallthru
      _
    // Predicated region
    $region6: #{tpu_custom_call.1} parent=1 // pred_check
      _
    $region7: #{tpu_custom_call.1} parent=1 // pred_check_branch
      %22 = sbr.rel (0) target = $region9
    $region8: #{tpu_custom_call.1} parent=1 // pred_region
      _
    $region9: #{tpu_custom_call.1} parent=1 // pred_fallthru
      _
    // Predicated region
    $region10: #{tpu_custom_call.1} parent=1 // pred_check
      _
    $region11: #{tpu_custom_call.1} parent=1 // pred_check_branch
      %24 = sbr.rel (0) target = $region13
    $region12: #{tpu_custom_call.1} parent=1 // pred_region
      %25 = dma.done [#allocation3], 256
    $region13: #{tpu_custom_call.1} parent=1 // pred_fallthru
      _
    %v26 = vld [vmem:[#allocation2] sm:$0xff]
    %v27 = vld [vmem:[#allocation2 + $0x8] sm:$0xff]
    %v28 = vmul.f32 %v26, %v26
    %v29 = vmul.f32 %v27, %v27
    %30 = vadd.xlane.f32.xlu0 %v28
    %v31 = vpop.xlane.xlu0 %30
    %32 = vadd.xlane.f32.xlu0 %v29
    %v33 = vpop.xlane.xlu0 %32
    %v34 = vrcp.pop 128.0
    %v35 = vmul.f32 %v31, %v34
    %v36 = vmul.f32 %v33, %v34
    %v37 = vadd.f32 %v35, 1e-06
    %v38 = vadd.f32 %v36, 1e-06
    %v39 = vrsqrt.pop %v37
    %v40 = vrsqrt.pop %v38
    %v41 = vmul.f32 %v26, %v39
    %v42 = vmul.f32 %v27, %v40
    %v43 = vld [vmem:[%s1] sm:$0x1]
    %v45 = vlaneseq
    %v46 = vshrl.u32 %v45, 7
    %v47 = vsub.s32 0, %v46
    %v48 = vrot.slane %v43, %v47
    %v50 = vmul.f32 %v48, %v41
    %v51 = vmul.f32 %v48, %v42
    %52 = vst [vmem:[#allocation5] sm:$0xff] %v50
    %53 = vst [vmem:[#allocation5 + $0x8] sm:$0xff] %v51
    // Predicated region
    $region14: #{tpu_custom_call.1} parent=1 // pred_check
      _
    $region15: #{tpu_custom_call.1} parent=1 // pred_check_branch
      %55 = sbr.rel (0) target = $region17
    $region16: #{tpu_custom_call.1} parent=1 // pred_region
      %s57 = ssub.s32 256, 256
      %58 = vsyncadd [#allocation4], %s57
      %s59 = sshll.u32 [#allocation5], 4
      %s60 = int_to_ptr.vmem [resolvable:$true] %s59
      %65 = dma.vmem_to_hbm [thread:$0]  %s60, 256, %s2, [#allocation4], 128, 128, 8
    $region17: #{tpu_custom_call.1} parent=1 // pred_fallthru
      _
    // Predicated region
    $region18: #{tpu_custom_call.1} parent=1 // pred_check
      _
    $region19: #{tpu_custom_call.1} parent=1 // pred_check_branch
      %67 = sbr.rel (0) target = $region21
    $region20: #{tpu_custom_call.1} parent=1 // pred_region
      %68 = dma.done [#allocation4], 256
    $region21: #{tpu_custom_call.1} parent=1 // pred_fallthru
      _
    %69 = vsyncpa [#allocation3], 1
    %70 = vsyncpa [#allocation4], 1

</llo_original>
